<compile_context>
chip_gen: v7x
topology: tpu7x:2x2x1
jax: 0.10.0
libtpu: 0.0.40
codegen_flags: <defaults>
</compile_context>

<pallas_src>
import jax
import jax.numpy as jnp
from jax.experimental import pallas as pl
from jax.experimental.pallas import tpu as pltpu


# ---------------------------------------------------------------------------
# Pallas kernel: per row-block  sigmoid( sum(enc_row * w_enc) + ev_logit_row )
# ---------------------------------------------------------------------------
def _masker_kernel(enc_ref, ev_ref, w_ref, out_ref):
    enc = enc_ref[...]                     # (R, dim)   streamed tile of flattened enc_outputs
    w = w_ref[...]                         # (1, dim)   lane-dense weight half, resident
    ev_logit = ev_ref[...]                 # (R, 1)     hoisted ev @ W[:dim] + b, per row
    # VPU broadcast-multiply + cross-lane reduce (XLU) -- no 1-column MXU matmul.
    logits = jnp.sum(enc * w, axis=-1, keepdims=True) + ev_logit   # (R, 1)
    out_ref[...] = jax.nn.sigmoid(logits)


def _round_up(x, m):
    return (x + m - 1) // m * m


def _choose_row_tile(rows, dim, target_bytes=4 * 1024 * 1024):
    """Pick a sublane-aligned row tile; ~4 MB/buffer keeps 2x-buffered tiles well
    under VMEM on all of v5e/v6e/v7x while staying large enough to amortize the
    ~0.35us per-grid-step overhead."""
    rows8 = _round_up(rows, 8)
    r = max(8, (target_bytes // max(1, dim * 4)) // 8 * 8)
    return min(r, rows8)


def masker_pallas(ev, enc_outputs, masker_w, masker_b):
    """sigmoid(cat([ev.expand(L,B,D), enc_outputs], 2) @ W + b) via Pallas."""
    seq_len, batch, dim = enc_outputs.shape
    assert ev.shape == (batch, dim)
    assert masker_w.shape == (2 * dim, 1)

    # Split the linear layer's weight outside the kernel (no in-kernel sublane slicing).
    w_ev = masker_w[:dim, 0]                       # (dim,)  multiplies ev
    w_enc = masker_w[dim:, 0]                      # (dim,)  multiplies enc_outputs
    bias = masker_b.reshape(())                    # scalar

    # Hoisted timestep-invariant term (includes the bias).
    ev_logit = ev @ w_ev + bias                    # (batch,)

    # Flatten (seq, batch) onto the sublane axis -- free row-major reshape.
    rows = seq_len * batch
    enc_flat = enc_outputs.reshape(rows, dim).astype(jnp.float32)
    ev_rows = jnp.tile(ev_logit, seq_len)[:, None].astype(jnp.float32)   # (rows, 1)

    R = _choose_row_tile(rows, dim)
    rows_padded = _round_up(rows, R)
    pad = rows_padded - rows
    if pad:
        enc_flat = jnp.pad(enc_flat, ((0, pad), (0, 0)))
        ev_rows = jnp.pad(ev_rows, ((0, pad), (0, 0)))

    w_enc_row = w_enc[None, :].astype(jnp.float32)  # (1, dim) lane-dense, resident

    out = pl.pallas_call(
        _masker_kernel,
        out_shape=jax.ShapeDtypeStruct((rows_padded, 1), jnp.float32),
        grid_spec=pltpu.PrefetchScalarGridSpec(
            num_scalar_prefetch=0,
            grid=(rows_padded // R,),
            in_specs=[
                pl.BlockSpec((R, dim), lambda i: (i, 0)),   # enc rows: streamed
                pl.BlockSpec((R, 1), lambda i: (i, 0)),     # hoisted ev term per row
                pl.BlockSpec((1, dim), lambda i: (0, 0)),   # weight half: resident
            ],
            out_specs=pl.BlockSpec((R, 1), lambda i: (i, 0)),
        ),
        compiler_params=pltpu.CompilerParams(
            dimension_semantics=("parallel",),              # megacore sharding on v7x
            vmem_limit_bytes=32 * 1024 * 1024,              # explicit: safe on v5e/v6e/v7x
        ),
    )(enc_flat, ev_rows, w_enc_row)

    return out[:rows].reshape(seq_len, batch, 1)


# ---------------------------------------------------------------------------
# Synthetic ev_generator (external injected module in the PyTorch code) — plain
# JAX glue.  Produces ev: (batch, dim) and enc_outputs: (seq, batch, dim).
# ---------------------------------------------------------------------------
def ev_generator(params, I_word, I_word_length, D_word, D_word_length,
                 ref_tgt_inputs, ref_tgt_lengths):
    emb = params["embedding"]                             # (vocab, dim)
    enc_outputs = emb[ref_tgt_inputs] @ params["W_enc"]   # (seq, batch, dim)
    i_pool = emb[I_word].mean(axis=0)                     # (batch, dim)
    d_pool = emb[D_word].mean(axis=0)                     # (batch, dim)
    ev = jnp.tanh((i_pool + d_pool) @ params["W_ev"])     # (batch, dim)
    return ev, enc_outputs


# ---------------------------------------------------------------------------
# templateGenerator.forward
# ---------------------------------------------------------------------------
def template_generator_forward(params, I_word, I_word_length, D_word,
                               D_word_length, ref_tgt_inputs, ref_tgt_lengths,
                               return_ev=False):
    ev, enc_outputs = ev_generator(params, I_word, I_word_length, D_word,
                                   D_word_length, ref_tgt_inputs, ref_tgt_lengths)
    # self.dropout(ev); self.dropout(enc_outputs) -> identity in eval mode
    ev_for_return = ev
    preds = masker_pallas(ev, enc_outputs, params["masker_w"], params["masker_b"])
    if return_ev:
        return preds, ev_for_return
    return preds


if __name__ == "__main__":
    # Small deterministic shapes
    batch = 2
    hidden = 32
    seq = 8         # ref_tgt length
    seq_i = 5       # I_word length
    seq_d = 6       # D_word length
    vocab = 20

    key = jax.random.PRNGKey(0)
    k_emb, k_wenc, k_wev, k_wm, k_i, k_d, k_r = jax.random.split(key, 7)

    params = {
        "embedding": jax.random.normal(k_emb, (vocab, hidden), jnp.float32) * 0.1,
        "W_enc": jax.random.normal(k_wenc, (hidden, hidden), jnp.float32) * 0.1,
        "W_ev": jax.random.normal(k_wev, (hidden, hidden), jnp.float32) * 0.1,
        "masker_w": jax.random.normal(k_wm, (2 * hidden, 1), jnp.float32) * 0.1,
        "masker_b": jnp.zeros((1, 1), jnp.float32),
    }

    # Sequence-first int token inputs (PyTorch convention: (len, batch))
    I_word = jax.random.randint(k_i, (seq_i, batch), 0, vocab)
    D_word = jax.random.randint(k_d, (seq_d, batch), 0, vocab)
    ref_tgt_inputs = jax.random.randint(k_r, (seq, batch), 0, vocab)
    I_word_length = [seq_i] * batch
    D_word_length = [seq_d] * batch
    ref_tgt_lengths = [seq] * batch

    preds, ev = template_generator_forward(
        params, I_word, I_word_length, D_word, D_word_length,
        ref_tgt_inputs, ref_tgt_lengths, return_ev=True)
    jax.block_until_ready(preds)
    jax.block_until_ready(ev)

    # Reference check in plain JAX (expand + cat + linear + sigmoid)
    ev_ref, enc_ref = ev_generator(params, I_word, I_word_length, D_word,
                                   D_word_length, ref_tgt_inputs, ref_tgt_lengths)
    ev_exp = jnp.broadcast_to(ev_ref[None], (seq, batch, hidden))
    cat = jnp.concatenate([ev_exp, enc_ref], axis=2)          # (seq, batch, 2*hidden)
    ref_preds = jax.nn.sigmoid(cat @ params["masker_w"] + params["masker_b"][0])
    assert preds.shape == (seq, batch, 1)
    assert jnp.allclose(preds, ref_preds, atol=1e-5), "mismatch vs reference"

    print("KERNEL_OK")
</pallas_src>

<mosaic_0001>
module attributes {stable_mosaic.version = 11 : i64} {
  func.func @_masker_kernel(%arg0: i32, %arg1: memref<16x32xf32, #tpu.memory_space<vmem>>, %arg2: memref<16x1xf32, #tpu.memory_space<vmem>>, %arg3: memref<1x32xf32, #tpu.memory_space<vmem>>, %arg4: memref<16x1xf32, #tpu.memory_space<vmem>>) attributes {dimension_semantics = [#tpu.dimension_semantics<parallel>], iteration_bounds = array<i64: 1>, scalar_prefetch = 0 : i64, scratch_operands = 0 : i64, tpu.core_type = #tpu.core_type<tc>, window_params = [{transform_indices = @transform_0, window_bounds = array<i64: 16, 32>}, {transform_indices = @transform_1, window_bounds = array<i64: 16, 1>}, {pipeline_mode = #tpu.pipeline_mode<synchronous>, transform_indices = @transform_2, window_bounds = array<i64: 1, 32>}, {transform_indices = @transform_3, window_bounds = array<i64: 16, 1>}]} {
    %c0 = arith.constant 0 : index
    %c0_0 = arith.constant 0 : index
    %0 = vector.load %arg1[%c0, %c0_0] : memref<16x32xf32, #tpu.memory_space<vmem>>, vector<16x32xf32>
    %c0_1 = arith.constant 0 : index
    %c0_2 = arith.constant 0 : index
    %1 = vector.load %arg3[%c0_1, %c0_2] : memref<1x32xf32, #tpu.memory_space<vmem>>, vector<1x32xf32>
    %c0_3 = arith.constant 0 : index
    %c0_4 = arith.constant 0 : index
    %2 = vector.load %arg2[%c0_3, %c0_4] : memref<16x1xf32, #tpu.memory_space<vmem>>, vector<16x1xf32>
    %3 = vector.broadcast %1 : vector<1x32xf32> to vector<16x32xf32>
    %4 = arith.mulf %0, %3 : vector<16x32xf32>
    %cst = arith.constant dense<0.000000e+00> : vector<16xf32>
    %5 = vector.multi_reduction <add>, %4, %cst [1] : vector<16x32xf32> to vector<16xf32>
    %6 = vector.shape_cast %5 : vector<16xf32> to vector<16x1xf32>
    %7 = arith.addf %6, %2 : vector<16x1xf32>
    %8 = arith.negf %7 : vector<16x1xf32>
    %9 = math.exp %8 : vector<16x1xf32>
    %cst_5 = arith.constant 1.000000e+00 : f32
    %10 = vector.broadcast %cst_5 : f32 to vector<16x1xf32>
    %11 = arith.addf %10, %9 : vector<16x1xf32>
    %12 = arith.divf %10, %11 : vector<16x1xf32>
    %c0_6 = arith.constant 0 : index
    %c0_7 = arith.constant 0 : index
    %13 = vector.load %arg4[%c0_6, %c0_7] : memref<16x1xf32, #tpu.memory_space<vmem>>, vector<16x1xf32>
    tpu.vector_store %arg4[%c0_6, %c0_7], %12 {strides = array<i32>} : memref<16x1xf32, #tpu.memory_space<vmem>>, vector<16x1xf32>,
    return
  }
  func.func @transform_0(%arg0: i32) -> (i32, i32) {
    %c0_i32 = arith.constant 0 : i32
    %c0_i32_0 = arith.constant 0 : i32
    return %arg0, %c0_i32 : i32, i32
  }
  func.func @transform_1(%arg0: i32) -> (i32, i32) {
    %c0_i32 = arith.constant 0 : i32
    %c0_i32_0 = arith.constant 0 : i32
    return %arg0, %c0_i32 : i32, i32
  }
  func.func @transform_2(%arg0: i32) -> (i32, i32) {
    %c0_i32 = arith.constant 0 : i32
    %c0_i32_0 = arith.constant 0 : i32
    %c0_i32_1 = arith.constant 0 : i32
    return %c0_i32, %c0_i32_0 : i32, i32
  }
  func.func @transform_3(%arg0: i32) -> (i32, i32) {
    %c0_i32 = arith.constant 0 : i32
    %c0_i32_0 = arith.constant 0 : i32
    return %arg0, %c0_i32 : i32, i32
  }
}

</mosaic_0001>

<llo_original>
// kernel: tpu_custom_call.1
$region0: #{tpu_custom_call.1}
  #allocation0 [shape = 'u32[]', space=smem, size = 0x4, offset = 0x4, fixed_abs, tag = 'smem constant byte address 0x4 - core index']
  #allocation1 [shape = 'u32[144,128]{1,0:T(1,128)}', space=vmem, size = 0x12000, scoped, tag = 'internal scratch']
  %s0 = inlined_call_operand.vmem [shape: f32[16,32], index: 0, kind: input, shape index: {}]
  %s1 = inlined_call_operand.vmem [shape: f32[16,1], index: 1, kind: input, shape index: {}]
  %s2 = inlined_call_operand.vmem [shape: f32[1,32], index: 2, kind: input, shape index: {}]
  %s3 = inlined_call_operand.vmem [shape: f32[16,1], index: 3, kind: output, shape index: {}]
  %s4 = sld [smem:[#allocation0]]
  $region22: #{tpu_custom_call.1} parent=0
    _
  %s6 = ssub.s32 1, %s4
  %s7 = scalar_select 0, %s6, %s4
  // Predicated region
  $region2: #{tpu_custom_call.1} parent=0 // pred_check
    _
  $region3: #{tpu_custom_call.1} parent=0 // pred_check_branch
    %9 = sbr.rel (0) target = $region5
  $region4: #{tpu_custom_call.1} parent=0 // pred_region
    _
  $region5: #{tpu_custom_call.1} parent=0 // pred_fallthru
    _
  // Predicated region
  $region6: #{tpu_custom_call.1} parent=0 // pred_check
    _
  $region7: #{tpu_custom_call.1} parent=0 // pred_check_branch
    %11 = sbr.rel (0) target = $region9
  $region8: #{tpu_custom_call.1} parent=0 // pred_region
    _
  $region9: #{tpu_custom_call.1} parent=0 // pred_fallthru
    _
  // Predicated region
  $region10: #{tpu_custom_call.1} parent=0 // pred_check
    _
  $region11: #{tpu_custom_call.1} parent=0 // pred_check_branch
    %13 = sbr.rel (0) target = $region13
  $region12: #{tpu_custom_call.1} parent=0 // pred_region
    _
  $region13: #{tpu_custom_call.1} parent=0 // pred_fallthru
    _
  %v14 = vld [vmem:[%s0] sm:$0xff]
  %v15 = vld [vmem:[%s0 + $0x8] sm:$0xff]
  %v16 = vld [vmem:[%s2] sm:$0x1]
  %v17 = vld [vmem:[%s1] sm:$0xff]
  %v18 = vld [vmem:[%s1 + $0x8] sm:$0xff]
  %v20 = vlaneseq
  %v21 = vshrl.u32 %v20, 7
  %v22 = vsub.s32 0, %v21
  %v23 = vrot.slane %v16, %v22
  %v25 = vmul.f32 %v14, %v23
  %v26 = vmul.f32 %v15, %v23
  %vm27 = vcmask 261120
  %v28 = vsel %vm27, %v25, 0.0
  %29 = vadd.xlane.f32.xlu0 %v28
  %v30 = vpop.xlane.xlu0 %29
  %v31 = vsel %vm27, %v26, 0.0
  %32 = vadd.xlane.f32.xlu0 %v31
  %v33 = vpop.xlane.xlu0 %32
  %v34 = vadd.f32 %v30, %v17
  %v35 = vadd.f32 %v33, %v18
  %v36 = vxor.u32 %v34, 2147483648
  %v37 = vxor.u32 %v35, 2147483648
  %v38 = vmul.f32 %v36, 1.442695
  %v39 = vpow.pop %v38
  %v40 = vmul.f32 %v37, 1.442695
  %v41 = vpow.pop %v40
  %v42 = vadd.f32 %v39, 1.0
  %v43 = vadd.f32 %v41, 1.0
  %v44 = vrcp.pop %v42
  %v45 = vmul.f32 1.0, %v44
  %v46 = vrcp.pop %v43
  %v47 = vmul.f32 1.0, %v46
  %vm48 = vcmask 7168
  %49 = vst.msk [vmem:[%s3] sm:$0xff] %vm48, %v45
  %50 = vst.msk [vmem:[%s3 + $0x8] sm:$0xff] %vm48, %v47
  // Predicated region
  $region14: #{tpu_custom_call.1} parent=0 // pred_check
    _
  $region15: #{tpu_custom_call.1} parent=0 // pred_check_branch
    %52 = sbr.rel (0) target = $region17
  $region16: #{tpu_custom_call.1} parent=0 // pred_region
    _
  $region17: #{tpu_custom_call.1} parent=0 // pred_fallthru
    _
  // Predicated region
  $region18: #{tpu_custom_call.1} parent=0 // pred_check
    _
  $region19: #{tpu_custom_call.1} parent=0 // pred_check_branch
    %54 = sbr.rel (0) target = $region21
  $region20: #{tpu_custom_call.1} parent=0 // pred_region
    _
  $region21: #{tpu_custom_call.1} parent=0 // pred_fallthru
    _

</llo_original>
